<compile_context>
chip_gen: v7x
topology: tpu7x:2x2x1
jax: 0.10.0
libtpu: 0.0.40
codegen_flags: <defaults>
</compile_context>

<pallas_src>
from functools import partial

import jax
import jax.numpy as jnp
import numpy as np
from jax.experimental import pallas as pl
from jax.experimental.pallas import tpu as pltpu


def nt_xent_kernel(zi_ref, zj_ref, row_ref, col_ref, znk_ref, znkt_ref, *,
                   tile_rows, inner_tiles, temperature, matmul_dtype):
    s = pl.program_id(0)                 # row-split index ("parallel"; one per TC on v7x)
    t = pl.program_id(1)                 # row-tile index within the split ("arbitrary")
    Tq = tile_rows
    inv_t = jnp.float32(1.0 / temperature)   # also the constant LSE shift (|logit| <= 1/T)
    eps2 = jnp.float32(1e-16)                # (eps=1e-8)^2: torch CosineSimilarity clamp

    @pl.when(t == 0)
    def _init():
        # Zero this split's accumulator outputs.
        row_ref[...] = jnp.zeros(row_ref.shape, jnp.float32)
        col_ref[...] = jnp.zeros(col_ref.shape, jnp.float32)
        # Normalize the keys once and cache them: (B, D) for the positives slice and
        # transposed (D, B) for the matmul, both already in the MXU operand dtype.
        zk = zj_ref[...].astype(jnp.float32)
        zk_inv = jax.lax.rsqrt(jnp.maximum(jnp.sum(zk * zk, axis=-1, keepdims=True), eps2))
        znk = zk * zk_inv
        znk_ref[...] = znk.astype(matmul_dtype)
        znkt_ref[...] = znk.T.astype(matmul_dtype)   # one-time transpose, amortized

    # Queries: this row tile of z_i, normalized in f32 with 1/T folded in.
    zq = zi_ref[...].astype(jnp.float32)                                    # (Tq, D)
    zq_inv = jax.lax.rsqrt(jnp.maximum(jnp.sum(zq * zq, axis=-1, keepdims=True), eps2))
    znq = zq * (zq_inv * inv_t)                                             # (Tq, D)

    # One MXU matmul per step: S row slab, f32 accumulation, cached transposed keys as RHS.
    tile = jnp.dot(znq.astype(matmul_dtype), znkt_ref[...],
                   preferred_element_type=jnp.float32)                      # (Tq, B)

    # Single exp pass (constant shift), shared by the row LSE and the column exp-sums.
    p = jnp.exp(tile - inv_t)                                               # (Tq, B)

    # Row-direction logsumexp (exact: constant shift instead of a running max).
    row_lse = inv_t + jnp.log(jnp.sum(p, axis=-1, keepdims=True))           # (Tq, 1)

    # Positives: diag(S) for this tile, straight from the cached normalized keys.
    row_start = pl.multiple_of((s * inner_tiles + t) * Tq, Tq)
    znk_rows = znk_ref[pl.ds(row_start, Tq), :].astype(jnp.float32)         # (Tq, D)
    pos = jnp.sum(znq * znk_rows, axis=-1, keepdims=True)                   # (Tq, 1) = S[r, r]

    # Accumulate per-row partials elementwise (scalar collapse happens in the wrapper)
    # and per-column exp-sums (turned into the column LSE in the wrapper).
    row_ref[...] += (row_lse - 2.0 * pos)[None, :, :]                       # (1, Tq, 1)
    col_ref[...] += jnp.sum(p, axis=0, keepdims=True)[None, :, :]           # (1, 1, B)


def _pick_row_tile(batch_size):
    # 256 keeps the (Tq, B) f32 slab + the exp temporary comfortably inside every chip's
    # scoped-VMEM defaults (v5e 16 MiB, v7x 32-of-64 MiB).  On v6e (128 MiB VMEM) pass
    # row_tile=512/1024 for very large batches to amortize per-step overhead.
    for t in (256, 128):
        if batch_size % t == 0:
            return t
    return batch_size  # full-extent fallback satisfies the (8, 128) block rule


def _vmem_estimate_bytes(B, D, Tq, mm_bytes):
    f32 = 4
    return (2 * Tq * D * f32            # z_i row tile (double-buffered)
            + 2 * B * D * f32           # resident z_j (double-buffered)
            + 2 * B * D * mm_bytes      # cached normalized + transposed keys
            + 3 * Tq * B * f32          # S slab + exp temporary + headroom
            + 8 * (Tq + B) * f32)       # accumulator outputs / small temporaries


def nt_xent_loss(z_i, z_j, temperature, *, matmul_dtype=jnp.bfloat16, row_tile=None):
    B, D = z_i.shape
    assert z_j.shape == (B, D)
    Tq = int(row_tile) if row_tile is not None else _pick_row_tile(B)
    assert B % Tq == 0, "row_tile must divide the batch size"
    n_tiles = B // Tq
    # Megacore-friendly split of the row tiles (leading "parallel" grid axis).  On v7x the
    # two TensorCores each take one half; on v5e/v6e the axis simply runs serially.
    n_split = 2 if (n_tiles % 2 == 0 and n_tiles >= 2) else 1
    inner_tiles = n_tiles // n_split

    kernel = partial(nt_xent_kernel, tile_rows=Tq, inner_tiles=inner_tiles,
                     temperature=float(temperature), matmul_dtype=matmul_dtype)

    cp_kwargs = dict(dimension_semantics=("parallel", "arbitrary"))
    est = _vmem_estimate_bytes(B, D, Tq, np.dtype(matmul_dtype).itemsize)
    if est > 12 * 1024 * 1024:
        # Raise the scoped-VMEM cap for large batches (v5e's default is only 16 MiB).
        # TODO(synk): column-tile the keys instead once B no longer fits v7x's 64 MiB.
        cp_kwargs["vmem_limit_bytes"] = int(min(2 * est, 100 * 1024 * 1024))

    row_part, col_part = pl.pallas_call(
        kernel,
        out_shape=(jax.ShapeDtypeStruct((n_split, Tq, 1), jnp.float32),
                   jax.ShapeDtypeStruct((n_split, 1, B), jnp.float32)),
        grid_spec=pltpu.PrefetchScalarGridSpec(
            num_scalar_prefetch=0,
            grid=(n_split, inner_tiles),
            in_specs=[
                pl.BlockSpec((Tq, D), lambda s, t: (s * inner_tiles + t, 0)),  # z_i row tile
                pl.BlockSpec((B, D), lambda s, t: (0, 0)),                     # z_j resident
            ],
            out_specs=(
                pl.BlockSpec((1, Tq, 1), lambda s, t: (s, 0, 0)),   # per-split row partials
                pl.BlockSpec((1, 1, B), lambda s, t: (s, 0, 0)),    # per-split column exp-sums
            ),
            scratch_shapes=[
                pltpu.VMEM((B, D), matmul_dtype),   # normalized keys (positives slice)
                pltpu.VMEM((D, B), matmul_dtype),   # normalized keys, transposed (matmul RHS)
            ],
        ),
        compiler_params=pltpu.CompilerParams(**cp_kwargs),
    )(z_i, z_j)

    # Tiny wrapper-side combine on (B,)-sized partials (needed anyway for the megacore split).
    shift = jnp.float32(1.0 / temperature)
    col_lse = shift + jnp.log(jnp.sum(col_part, axis=0))        # (1, B)
    total = jnp.sum(row_part) + jnp.sum(col_lse)
    return total / jnp.float32(2 * B)


def nt_xent_ref(z_i, z_j, temperature):
    """Pure-JAX reference of the torch module's math (correctness check)."""
    B = z_i.shape[0]
    N = 2 * B
    z = jnp.concatenate([z_i, z_j], axis=0)
    zn = z / jnp.maximum(jnp.linalg.norm(z, axis=-1, keepdims=True), 1e-8)
    sim = jnp.matmul(zn, zn.T, precision=jax.lax.Precision.HIGHEST) / temperature
    pos = jnp.concatenate([jnp.diagonal(sim, B), jnp.diagonal(sim, -B)])
    idx = jnp.arange(N)
    in_set = jnp.where(idx[:, None] < B, idx[None, :] >= B, idx[None, :] < B)
    masked = jnp.where(in_set, sim, -jnp.inf)
    lse = jax.scipy.special.logsumexp(masked, axis=-1)
    return jnp.sum(lse - pos) / N


if __name__ == "__main__":
    temperature = 0.5
    key = jax.random.PRNGKey(0)
    k1, k2, k3, k4 = jax.random.split(key, 4)

    def check(zi, zj, rtol, atol, **kw):
        loss = jax.block_until_ready(nt_xent_loss(zi, zj, temperature, **kw))
        ref = nt_xent_ref(zi, zj, temperature)
        assert np.allclose(np.asarray(loss), np.asarray(ref), rtol=rtol, atol=atol), \
            (kw, float(loss), float(ref))

    # Module-default shape (batch_size = 8): single-tile path.
    z_i = jax.random.normal(k1, (8, 32), dtype=jnp.float32)
    z_j = jax.random.normal(k2, (8, 32), dtype=jnp.float32)
    check(z_i, z_j, 5e-3, 5e-3)                                   # default: bf16 MXU operands
    check(z_i, z_j, 1e-4, 5e-4, matmul_dtype=jnp.float32)         # exact-math check

    # Larger batch: multi-tile grid, megacore row split, column exp-sum accumulation.
    z_i2 = jax.random.normal(k3, (512, 64), dtype=jnp.float32)
    z_j2 = jax.random.normal(k4, (512, 64), dtype=jnp.float32)
    check(z_i2, z_j2, 5e-3, 5e-3)                                 # default Tq=256, 2x1 grid
    check(z_i2, z_j2, 1e-4, 5e-4, matmul_dtype=jnp.float32, row_tile=128)   # 2x2 grid, exact

    print("KERNEL_OK")
</pallas_src>

<mosaic_0001>
module attributes {stable_mosaic.version = 11 : i64} {
  func.func @nt_xent_kernel(%arg0: i32, %arg1: i32, %arg2: memref<8x32xf32, #tpu.memory_space<vmem>>, %arg3: memref<8x32xf32, #tpu.memory_space<vmem>>, %arg4: memref<1x8x1xf32, #tpu.memory_space<vmem>>, %arg5: memref<1x1x8xf32, #tpu.memory_space<vmem>>, %arg6: memref<8x32xbf16, #tpu.memory_space<vmem>>, %arg7: memref<32x8xbf16, #tpu.memory_space<vmem>>) attributes {dimension_semantics = [#tpu.dimension_semantics<parallel>, #tpu.dimension_semantics<arbitrary>], iteration_bounds = array<i64: 1, 1>, scalar_prefetch = 0 : i64, scratch_operands = 2 : i64, tpu.core_type = #tpu.core_type<tc>, window_params = [{transform_indices = @transform_0, window_bounds = array<i64: 8, 32>}, {pipeline_mode = #tpu.pipeline_mode<synchronous>, transform_indices = @transform_1, window_bounds = array<i64: 8, 32>}, {transform_indices = @transform_2, window_bounds = array<i64: 1, 8, 1>}, {transform_indices = @transform_3, window_bounds = array<i64: 1, 1, 8>}]} {
    %c0_i32 = arith.constant 0 : i32
    %0 = arith.cmpi eq, %arg1, %c0_i32 : i32
    %1 = arith.extui %0 : i1 to i32
    %cst = arith.constant 1.000000e-16 : f32
    %c0_i32_0 = arith.constant 0 : i32
    %2 = arith.cmpi ne, %1, %c0_i32_0 : i32
    scf.if %2 {
      %cst_27 = arith.constant 0.000000e+00 : f32
      %48 = vector.broadcast %cst_27 : f32 to vector<1x8x1xf32>
      %c0_28 = arith.constant 0 : index
      %c0_29 = arith.constant 0 : index
      %c0_30 = arith.constant 0 : index
      %49 = vector.load %arg4[%c0_28, %c0_29, %c0_30] : memref<1x8x1xf32, #tpu.memory_space<vmem>>, vector<1x8x1xf32>
      tpu.vector_store %arg4[%c0_28, %c0_29, %c0_30], %48 {strides = array<i32>} : memref<1x8x1xf32, #tpu.memory_space<vmem>>, vector<1x8x1xf32>,
      %cst_31 = arith.constant 0.000000e+00 : f32
      %50 = vector.broadcast %cst_31 : f32 to vector<1x1x8xf32>
      %c0_32 = arith.constant 0 : index
      %c0_33 = arith.constant 0 : index
      %c0_34 = arith.constant 0 : index
      %51 = vector.load %arg5[%c0_32, %c0_33, %c0_34] : memref<1x1x8xf32, #tpu.memory_space<vmem>>, vector<1x1x8xf32>
      tpu.vector_store %arg5[%c0_32, %c0_33, %c0_34], %50 {strides = array<i32>} : memref<1x1x8xf32, #tpu.memory_space<vmem>>, vector<1x1x8xf32>,
      %c0_35 = arith.constant 0 : index
      %c0_36 = arith.constant 0 : index
      %52 = vector.load %arg3[%c0_35, %c0_36] : memref<8x32xf32, #tpu.memory_space<vmem>>, vector<8x32xf32>
      %53 = arith.mulf %52, %52 : vector<8x32xf32>
      %cst_37 = arith.constant dense<0.000000e+00> : vector<8xf32>
      %54 = vector.multi_reduction <add>, %53, %cst_37 [1] : vector<8x32xf32> to vector<8xf32>
      %55 = vector.shape_cast %54 : vector<8xf32> to vector<8x1xf32>
      %56 = vector.broadcast %cst : f32 to vector<8x1xf32>
      %57 = arith.maximumf %55, %56 : vector<8x1xf32>
      %58 = math.rsqrt %57 : vector<8x1xf32>
      %59 = vector.broadcast %58 : vector<8x1xf32> to vector<8x32xf32>
      %60 = arith.mulf %52, %59 : vector<8x32xf32>
      %61 = arith.truncf %60 : vector<8x32xf32> to vector<8x32xbf16>
      %c0_38 = arith.constant 0 : index
      %c0_39 = arith.constant 0 : index
      %62 = vector.load %arg6[%c0_38, %c0_39] : memref<8x32xbf16, #tpu.memory_space<vmem>>, vector<8x32xbf16>
      tpu.vector_store %arg6[%c0_38, %c0_39], %61 {strides = array<i32>} : memref<8x32xbf16, #tpu.memory_space<vmem>>, vector<8x32xbf16>,
      %63 = tpu.transpose %60, [1, 0] : vector<8x32xf32> -> vector<32x8xf32>
      %64 = arith.truncf %63 : vector<32x8xf32> to vector<32x8xbf16>
      %c0_40 = arith.constant 0 : index
      %c0_41 = arith.constant 0 : index
      %65 = vector.load %arg7[%c0_40, %c0_41] : memref<32x8xbf16, #tpu.memory_space<vmem>>, vector<32x8xbf16>
      tpu.vector_store %arg7[%c0_40, %c0_41], %64 {strides = array<i32>} : memref<32x8xbf16, #tpu.memory_space<vmem>>, vector<32x8xbf16>,
    } else {
    }
    %c0 = arith.constant 0 : index
    %c0_1 = arith.constant 0 : index
    %3 = vector.load %arg2[%c0, %c0_1] : memref<8x32xf32, #tpu.memory_space<vmem>>, vector<8x32xf32>
    %4 = arith.mulf %3, %3 : vector<8x32xf32>
    %cst_2 = arith.constant dense<0.000000e+00> : vector<8xf32>
    %5 = vector.multi_reduction <add>, %4, %cst_2 [1] : vector<8x32xf32> to vector<8xf32>
    %6 = vector.shape_cast %5 : vector<8xf32> to vector<8x1xf32>
    %cst_3 = arith.constant 1.000000e-16 : f32
    %7 = vector.broadcast %cst_3 : f32 to vector<8x1xf32>
    %8 = arith.maximumf %6, %7 : vector<8x1xf32>
    %9 = math.rsqrt %8 : vector<8x1xf32>
    %cst_4 = arith.constant 2.000000e+00 : f32
    %10 = vector.broadcast %cst_4 : f32 to vector<8x1xf32>
    %11 = arith.mulf %9, %10 : vector<8x1xf32>
    %12 = vector.broadcast %11 : vector<8x1xf32> to vector<8x32xf32>
    %13 = arith.mulf %3, %12 : vector<8x32xf32>
    %14 = arith.truncf %13 : vector<8x32xf32> to vector<8x32xbf16>
    %c0_5 = arith.constant 0 : index
    %c0_6 = arith.constant 0 : index
    %15 = vector.load %arg7[%c0_5, %c0_6] : memref<32x8xbf16, #tpu.memory_space<vmem>>, vector<32x8xbf16>
    %cst_7 = arith.constant dense<0.000000e+00> : vector<8x8xf32>
    %16 = tpu.matmul %14, %15, %cst_7 {dimension_numbers = #tpu.dot_dimension_numbers<[1], [0], [0], [1], [0, 0, 1, 1], [], []>} : vector<8x32xbf16>, vector<32x8xbf16>, vector<8x8xf32> -> vector<8x8xf32>
    %cst_8 = arith.constant 2.000000e+00 : f32
    %17 = vector.broadcast %cst_8 : f32 to vector<8x8xf32>
    %18 = arith.subf %16, %17 : vector<8x8xf32>
    %19 = math.exp %18 : vector<8x8xf32>
    %cst_9 = arith.constant dense<0.000000e+00> : vector<8xf32>
    %20 = vector.multi_reduction <add>, %19, %cst_9 [1] : vector<8x8xf32> to vector<8xf32>
    %21 = vector.shape_cast %20 : vector<8xf32> to vector<8x1xf32>
    %22 = math.log %21 : vector<8x1xf32>
    %cst_10 = arith.constant 2.000000e+00 : f32
    %23 = vector.broadcast %cst_10 : f32 to vector<8x1xf32>
    %24 = arith.addf %23, %22 : vector<8x1xf32>
    %c1_i32 = arith.constant 1 : i32
    %25 = arith.muli %arg0, %c1_i32 : i32
    %26 = arith.addi %25, %arg1 : i32
    %c8_i32 = arith.constant 8 : i32
    %27 = arith.muli %26, %c8_i32 : i32
    %28 = tpu.assume_multiple %27, 8 : i32
    %29 = arith.index_cast %28 : i32 to index
    %c0_11 = arith.constant 0 : index
    %30 = vector.load %arg6[%29, %c0_11] : memref<8x32xbf16, #tpu.memory_space<vmem>>, vector<8x32xbf16>
    %31 = arith.extf %30 : vector<8x32xbf16> to vector<8x32xf32>
    %32 = arith.mulf %13, %31 : vector<8x32xf32>
    %cst_12 = arith.constant dense<0.000000e+00> : vector<8xf32>
    %33 = vector.multi_reduction <add>, %32, %cst_12 [1] : vector<8x32xf32> to vector<8xf32>
    %34 = vector.shape_cast %33 : vector<8xf32> to vector<8x1xf32>
    %c0_13 = arith.constant 0 : index
    %c0_14 = arith.constant 0 : index
    %c0_15 = arith.constant 0 : index
    %35 = vector.load %arg4[%c0_13, %c0_14, %c0_15] : memref<1x8x1xf32, #tpu.memory_space<vmem>>, vector<1x8x1xf32>
    %cst_16 = arith.constant 2.000000e+00 : f32
    %36 = vector.broadcast %cst_16 : f32 to vector<8x1xf32>
    %37 = arith.mulf %36, %34 : vector<8x1xf32>
    %38 = arith.subf %24, %37 : vector<8x1xf32>
    %39 = vector.shape_cast %38 : vector<8x1xf32> to vector<1x8x1xf32>
    %40 = arith.addf %35, %39 : vector<1x8x1xf32>
    %c0_17 = arith.constant 0 : index
    %c0_18 = arith.constant 0 : index
    %c0_19 = arith.constant 0 : index
    %41 = vector.load %arg4[%c0_17, %c0_18, %c0_19] : memref<1x8x1xf32, #tpu.memory_space<vmem>>, vector<1x8x1xf32>
    tpu.vector_store %arg4[%c0_17, %c0_18, %c0_19], %40 {strides = array<i32>} : memref<1x8x1xf32, #tpu.memory_space<vmem>>, vector<1x8x1xf32>,
    %c0_20 = arith.constant 0 : index
    %c0_21 = arith.constant 0 : index
    %c0_22 = arith.constant 0 : index
    %42 = vector.load %arg5[%c0_20, %c0_21, %c0_22] : memref<1x1x8xf32, #tpu.memory_space<vmem>>, vector<1x1x8xf32>
    %cst_23 = arith.constant dense<0.000000e+00> : vector<8xf32>
    %43 = vector.multi_reduction <add>, %19, %cst_23 [0] : vector<8x8xf32> to vector<8xf32>
    %44 = vector.shape_cast %43 : vector<8xf32> to vector<1x8xf32>
    %45 = vector.shape_cast %44 : vector<1x8xf32> to vector<1x1x8xf32>
    %46 = arith.addf %42, %45 : vector<1x1x8xf32>
    %c0_24 = arith.constant 0 : index
    %c0_25 = arith.constant 0 : index
    %c0_26 = arith.constant 0 : index
    %47 = vector.load %arg5[%c0_24, %c0_25, %c0_26] : memref<1x1x8xf32, #tpu.memory_space<vmem>>, vector<1x1x8xf32>
    tpu.vector_store %arg5[%c0_24, %c0_25, %c0_26], %46 {strides = array<i32>} : memref<1x1x8xf32, #tpu.memory_space<vmem>>, vector<1x1x8xf32>,
    return
  }
  func.func @transform_0(%arg0: i32, %arg1: i32) -> (i32, i32) {
    %c1_i32 = arith.constant 1 : i32
    %0 = arith.muli %arg0, %c1_i32 : i32
    %1 = arith.addi %0, %arg1 : i32
    %c0_i32 = arith.constant 0 : i32
    %c0_i32_0 = arith.constant 0 : i32
    return %1, %c0_i32 : i32, i32
  }
  func.func @transform_1(%arg0: i32, %arg1: i32) -> (i32, i32) {
    %c0_i32 = arith.constant 0 : i32
    %c0_i32_0 = arith.constant 0 : i32
    %c0_i32_1 = arith.constant 0 : i32
    return %c0_i32, %c0_i32_0 : i32, i32
  }
  func.func @transform_2(%arg0: i32, %arg1: i32) -> (i32, i32, i32) {
    %c0_i32 = arith.constant 0 : i32
    %c0_i32_0 = arith.constant 0 : i32
    %c0_i32_1 = arith.constant 0 : i32
    return %arg0, %c0_i32, %c0_i32_0 : i32, i32, i32
  }
  func.func @transform_3(%arg0: i32, %arg1: i32) -> (i32, i32, i32) {
    %c0_i32 = arith.constant 0 : i32
    %c0_i32_0 = arith.constant 0 : i32
    %c0_i32_1 = arith.constant 0 : i32
    return %arg0, %c0_i32, %c0_i32_0 : i32, i32, i32
  }
}

</mosaic_0001>

<llo_original>
// kernel: tpu_custom_call.1
$region0: #{tpu_custom_call.1}
  #allocation0 [shape = 'u32[]', space=smem, size = 0x4, offset = 0x4, fixed_abs, tag = 'smem constant byte address 0x4 - core index']
  #allocation1 [shape = 'u32[144,128]{1,0:T(1,128)}', space=vmem, size = 0x12000, scoped, tag = 'internal scratch']
  #allocation2 [shape = 'bf16[8,32]{1,0:T(8,128)(2,1)}', space=vmem, size = 0x800, scoped, tag = 'scratch operand']
  #allocation3 [shape = 'bf16[32,8]{1,0:T(16,128)(2,1)}', space=vmem, size = 0x2000, scoped, tag = 'scratch operand']
  %s0 = inlined_call_operand.hbm [shape: f32[8,32], index: 0, kind: input, shape index: {}]
  %s1 = inlined_call_operand.hbm [shape: f32[8,32], index: 1, kind: input, shape index: {}]
  %s2 = inlined_call_operand.vmem [shape: f32[1,8,1], index: 2, kind: output, shape index: {0}]
  %s3 = inlined_call_operand.hbm [shape: f32[1,1,8], index: 3, kind: output, shape index: {1}]
  %4 = xla_tuple %s2, %s3
  %s5 = sld [smem:[#allocation0]]
  $region38: #{tpu_custom_call.1} parent=0
    _
  %s7 = ssub.s32 1, %s5
  %s8 = scalar_select 0, %s7, %s5
  $region1: #{tpu_custom_call.1} parent=0
    #allocation4 [shape = 'u8[4096]{0}', space=vmem, size = 0x1000, scoped, tag = 'input window, operand 0, single buffered']
    #allocation5 [shape = 's32[1]{0}', space=sflag, size = 0x4, scoped, tag = 'scoped memory for tpu_custom_call.1']
    #allocation6 [shape = 's32[1]{0}', space=sflag, size = 0x4, scoped, tag = 'scoped memory for tpu_custom_call.1']
    #allocation7 [shape = 'u8[4096]{0}', space=vmem, size = 0x1000, scoped, tag = 'input window, operand 1, single buffered']
    #allocation8 [shape = 's32[1]{0}', space=sflag, size = 0x4, scoped, tag = 'scoped memory for tpu_custom_call.1']
    #allocation9 [shape = 'u8[512]{0}', space=vmem, size = 0x400, scoped, tag = 'output window, operand 1, single buffered']
    %9 = vsyncpa [#allocation5], 0
    %10 = vsyncpa [#allocation8], 0
    %11 = vsyncpa [#allocation6], 0
    // Predicated region
    $region2: #{tpu_custom_call.1} parent=1 // pred_check
      _
    $region3: #{tpu_custom_call.1} parent=1 // pred_check_branch
      %13 = sbr.rel (0) target = $region5
    $region4: #{tpu_custom_call.1} parent=1 // pred_region
      %s14 = sadd.s32 0, 0
      %s16 = ssub.s32 128, 128
      %17 = vsyncadd [#allocation5], %s16
      %s18 = smul.addr %s14, 128
      %s19 = scalar_lea.hbm %s0, %s18
      %s21 = sshll.u32 [#allocation4], 4
      %s22 = int_to_ptr.vmem [resolvable:$true] %s21
      %24 = dma.hbm_to_vmem [thread:$0]  %s19, 128, %s22, [#allocation5]
    $region5: #{tpu_custom_call.1} parent=1 // pred_fallthru
      _
    // Predicated region
    $region6: #{tpu_custom_call.1} parent=1 // pred_check
      _
    $region7: #{tpu_custom_call.1} parent=1 // pred_check_branch
      %26 = sbr.rel (0) target = $region9
    $region8: #{tpu_custom_call.1} parent=1 // pred_region
      %s28 = ssub.s32 128, 128
      %29 = vsyncadd [#allocation8], %s28
      %s31 = sshll.u32 [#allocation7], 4
      %s32 = int_to_ptr.vmem [resolvable:$true] %s31
      %34 = dma.hbm_to_vmem [thread:$0]  %s1, 128, %s32, [#allocation8]
    $region9: #{tpu_custom_call.1} parent=1 // pred_fallthru
      _
    // Predicated region
    $region10: #{tpu_custom_call.1} parent=1 // pred_check
      _
    $region11: #{tpu_custom_call.1} parent=1 // pred_check_branch
      %36 = sbr.rel (0) target = $region13
    $region12: #{tpu_custom_call.1} parent=1 // pred_region
      %37 = dma.done [#allocation5], 128
    $region13: #{tpu_custom_call.1} parent=1 // pred_fallthru
      _
    // Predicated region
    $region14: #{tpu_custom_call.1} parent=1 // pred_check
      _
    $region15: #{tpu_custom_call.1} parent=1 // pred_check_branch
      %39 = sbr.rel (0) target = $region17
    $region16: #{tpu_custom_call.1} parent=1 // pred_region
      %40 = dma.done [#allocation8], 128
    $region17: #{tpu_custom_call.1} parent=1 // pred_fallthru
      _
    %s41 = sadd.s32 0, 0
    %p43 = scmp.eq.s32.totalorder 0, 0
    // Predicated region
    $region18: #{tpu_custom_call.1} parent=1 // pred_check
      %p44 = pneg %p43
    $region19: #{tpu_custom_call.1} parent=1 // pred_check_branch
      %46 = sbr.rel (%p44) target = $region21
    $region20: #{tpu_custom_call.1} parent=1 // pred_region
      %vm47 = vcmask 7168
      %48 = vst.msk [vmem:[%s2] sm:$0xff] %vm47, 0.0
      %vm49 = vcmask 57344
      %50 = vst.msk [vmem:[#allocation9] sm:$0x1] %vm49, 0.0
      %v51 = vld [vmem:[#allocation7] sm:$0xff]
      %v52 = vmul.f32 %v51, %v51
      %vm53 = vcmask 261120
      %v54 = vsel %vm53, %v52, 0.0
      %55 = vadd.xlane.f32.xlu0 %v54
      %v56 = vpop.xlane.xlu0 %55
      %v57 = vmax.f32 %v56, 1e-16
      %v58 = vrsqrt.pop %v57
      %v59 = vmul.f32 %v51, %v58
      %v60 = vpack.c.bf16 %v59, %v59
      %vm61 = vcmask 257024
      %62 = vst.msk [vmem:[#allocation2] sm:$0xf] %vm61, %v60
      %63 = vxpose.xlu0.b32.start [1/16] %v59, 128
      %64 = vxpose.xlu0.b32.cont [2/16] 0.0, 128
      %65 = vxpose.xlu0.b32.cont [3/16] 0.0, 128
      %66 = vxpose.xlu0.b32.cont [4/16] 0.0, 128
      %67 = vxpose.xlu0.b32.cont [5/16] 0.0, 128
      %68 = vxpose.xlu0.b32.cont [6/16] 0.0, 128
      %69 = vxpose.xlu0.b32.cont [7/16] 0.0, 128
      %70 = vxpose.xlu0.b32.cont [8/16] 0.0, 128
      %71 = vxpose.xlu0.b32.cont [9/16] 0.0, 128
      %72 = vxpose.xlu0.b32.cont [10/16] 0.0, 128
      %73 = vxpose.xlu0.b32.cont [11/16] 0.0, 128
      %74 = vxpose.xlu0.b32.cont [12/16] 0.0, 128
      %75 = vxpose.xlu0.b32.cont [13/16] 0.0, 128
      %76 = vxpose.xlu0.b32.cont [14/16] 0.0, 128
      %77 = vxpose.xlu0.b32.cont [15/16] 0.0, 128
      %78 = vxpose.xlu0.b32.end [16/16] 0.0, 128
      %v79 = vpop.trf.xlu0
      %v80 = vpop.trf.xlu0
      %v81 = vpop.trf.xlu0
      %v82 = vpop.trf.xlu0
      %v83 = vpop.trf.xlu0
      %v84 = vpop.trf.xlu0
      %v85 = vpop.trf.xlu0
      %v86 = vpop.trf.xlu0
      %v87 = vpop.trf.xlu0
      %v88 = vpop.trf.xlu0
      %v89 = vpop.trf.xlu0
      %v90 = vpop.trf.xlu0
      %v91 = vpop.trf.xlu0
      %v92 = vpop.trf.xlu0
      %v93 = vpop.trf.xlu0
      %v94 = vpop.trf.xlu0
      %v95 = vpack.c.bf16 %v80, %v79
      %v96 = vpack.c.bf16 %v82, %v81
      %vm97 = vcmask 64512
      %98 = vst.msk [vmem:[#allocation3] sm:$0xff] %vm97, %v95
      %99 = vst.msk [vmem:[#allocation3 + $0x8] sm:$0xff] %vm97, %v96
    $region21: #{tpu_custom_call.1} parent=1 // pred_fallthru
      _
    %v100 = vld [vmem:[#allocation4] sm:$0xff]
    %v101 = vmul.f32 %v100, %v100
    %vm102 = vcmask 261120
    %v103 = vsel %vm102, %v101, 0.0
    %104 = vadd.xlane.f32.xlu0 %v103
    %v105 = vpop.xlane.xlu0 %104
    %v106 = vmax.f32 %v105, 1e-16
    %v107 = vrsqrt.pop %v106
    %v108 = vmul.f32 %v107, 2.0
    %v109 = vmul.f32 %v100, %v108
    %v110 = vpack.c.bf16 %v109, %v109
    %v111 = vld [vmem:[#allocation3] sm:$0xff]
    %v112 = vld [vmem:[#allocation3 + $0x8] sm:$0xff]
    %v114 = vsel %vm102, %v110, 0
    %116 = vmatprep.subr.bf16.mxu0 0
    %117 = vmatpush1.bf16.msra.mxu0 %v111
    %118 = vmatprep.subr.bf16.mxu0 0
    %119 = vmatpush1.bf16.msra.mxu0 %v112
    %120 = vmatprep.subr.bf16.mxu0 0
    %121 = vmatpush1.bf16.msra.mxu0 0
    %122 = vmatprep.subr.bf16.mxu0 0
    %123 = vmatpush1.bf16.msra.mxu0 0
    %124 = vmatprep.subr.bf16.mxu0 0
    %125 = vmatpush1.bf16.msra.mxu0 0
    %126 = vmatprep.subr.bf16.mxu0 0
    %127 = vmatpush1.bf16.msra.mxu0 0
    %128 = vmatprep.subr.bf16.mxu0 0
    %129 = vmatpush1.bf16.msra.mxu0 0
    %130 = vmatprep.subr.bf16.mxu0 0
    %131 = vmatpush1.bf16.msra.mxu0 0
    %132 = vmatprep.subr.bf16.mxu0 0
    %133 = vmatpush1.bf16.msra.mxu0 0
    %134 = vmatprep.subr.bf16.mxu0 0
    %135 = vmatpush1.bf16.msra.mxu0 0
    %136 = vmatprep.subr.bf16.mxu0 0
    %137 = vmatpush1.bf16.msra.mxu0 0
    %138 = vmatprep.subr.bf16.mxu0 0
    %139 = vmatpush1.bf16.msra.mxu0 0
    %140 = vmatprep.subr.bf16.mxu0 0
    %141 = vmatpush1.bf16.msra.mxu0 0
    %142 = vmatprep.subr.bf16.mxu0 0
    %143 = vmatpush1.bf16.msra.mxu0 0
    %144 = vmatprep.subr.bf16.mxu0 0
    %145 = vmatpush1.bf16.msra.mxu0 0
    %146 = vmatprep.subr.bf16.mxu0 0
    %147 = vmatpush1.bf16.msra.mxu0 0
    %148 = vmatprep.mubr.bf16.mxu0 0
    %149 = vmatmul.mubr.bf16.gmra.mrb[0].mxu0 %v114
    %v150 = vpop.f32.mrb[0].mxu0
    %v151 = vadd.f32 0.0, %v150
    %v152 = vpop.f32.mrb[0].mxu0
    %v153 = vpop.f32.mrb[0].mxu0
    %v154 = vpop.f32.mrb[0].mxu0
    %155 = vdwg.mxu0
    %v156 = vsub.f32 %v151, 2.0
    %v157 = vmul.f32 %v156, 1.442695
    %v158 = vpow.pop %v157
    %vm159 = vcmask 64512
    %v160 = vsel %vm159, %v158, 0.0
    %161 = vadd.xlane.f32.xlu0 %v160
    %v162 = vpop.xlane.xlu0 %161
    %v163 = vlog2.pop %v162
    %v164 = vmul.f32 %v163, 0.6931472
    %v165 = vadd.f32 %v164, 2.0
    %s166 = sadd.s32 0, 0
    %s167 = smul.u32 %s166, 8
    %s168 = sshra.s32 %s167, 3
    %s169 = sand.u32 %s167, 7
    %s170 = smul.addr %s168, 4
    %s171 = scalar_lea.vmem [#allocation2], %s170
    %v172 = vld [vmem:[%s171] sm:$0xf]
    %v173 = vunpack.c.l.bf16 %v172
    %v174 = vmul.f32 %v109, %v173
    %v175 = vsel %vm102, %v174, 0.0
    %176 = vadd.xlane.f32.xlu0 %v175
    %v177 = vpop.xlane.xlu0 %176
    %v178 = vld [vmem:[%s2] sm:$0xff]
    %v179 = vmul.f32 %v177, 2.0
    %v180 = vsub.f32 %v165, %v179
    %v181 = vadd.f32 %v178, %v180
    %vm182 = vcmask 7168
    %183 = vst.msk [vmem:[%s2] sm:$0xff] %vm182, %v181
    %v184 = vld [vmem:[#allocation9] sm:$0x1]
    %v185 = vrot.slane %v160, 4
    %v186 = vadd.f32 %v160, %v185
    %v187 = vrot.slane %v186, 2
    %v188 = vadd.f32 %v186, %v187
    %v189 = vrot.slane %v188, 1
    %v190 = vadd.f32 %v188, %v189
    %v191 = vadd.f32 %v184, %v190
    %vm192 = vcmask 57344
    %193 = vst.msk [vmem:[#allocation9] sm:$0x1] %vm192, %v191
    // Predicated region
    $region22: #{tpu_custom_call.1} parent=1 // pred_check
      _
    $region23: #{tpu_custom_call.1} parent=1 // pred_check_branch
      %195 = sbr.rel (0) target = $region25
    $region24: #{tpu_custom_call.1} parent=1 // pred_region
      _
    $region25: #{tpu_custom_call.1} parent=1 // pred_fallthru
      _
    // Predicated region
    $region26: #{tpu_custom_call.1} parent=1 // pred_check
      _
    $region27: #{tpu_custom_call.1} parent=1 // pred_check_branch
      %197 = sbr.rel (0) target = $region29
    $region28: #{tpu_custom_call.1} parent=1 // pred_region
      %s199 = ssub.s32 16, 16
      %200 = vsyncadd [#allocation6], %s199
      %s202 = sshll.u32 [#allocation9], 4
      %s203 = int_to_ptr.vmem [resolvable:$true] %s202
      %205 = dma.vmem_to_hbm [thread:$0]  %s203, 16, %s3, [#allocation6]
    $region29: #{tpu_custom_call.1} parent=1 // pred_fallthru
      _
    // Predicated region
    $region30: #{tpu_custom_call.1} parent=1 // pred_check
      _
    $region31: #{tpu_custom_call.1} parent=1 // pred_check_branch
      %207 = sbr.rel (0) target = $region33
    $region32: #{tpu_custom_call.1} parent=1 // pred_region
      _
    $region33: #{tpu_custom_call.1} parent=1 // pred_fallthru
      _
    // Predicated region
    $region34: #{tpu_custom_call.1} parent=1 // pred_check
      _
    $region35: #{tpu_custom_call.1} parent=1 // pred_check_branch
      %209 = sbr.rel (0) target = $region37
    $region36: #{tpu_custom_call.1} parent=1 // pred_region
      %210 = dma.done [#allocation6], 16
    $region37: #{tpu_custom_call.1} parent=1 // pred_fallthru
      _
    %211 = vsyncpa [#allocation5], 1
    %212 = vsyncpa [#allocation8], 1
    %213 = vsyncpa [#allocation6], 1

</llo_original>
